<compile_context>
chip_gen: v5e
topology: v5e:2x2
jax: 0.10.0
libtpu: 0.0.40
codegen_flags: <defaults>
</compile_context>

<pallas_src>
import functools

import jax
import jax.numpy as jnp
from jax.experimental import pallas as pl
from jax.experimental.pallas import tpu as pltpu


def _round_up(x, m):
    return (x + m - 1) // m * m


_VMEM_LIMIT_CACHE = None


def _vmem_limit_bytes():
    """Generation-aware VMEM budget (~3/4 of physical), cached."""
    global _VMEM_LIMIT_CACHE
    if _VMEM_LIMIT_CACHE is None:
        try:
            cap = int(pltpu.get_tpu_info().vmem_capacity_bytes)
        except Exception:
            cap = 64 * 1024 * 1024          # conservative (v7x-sized) fallback
        _VMEM_LIMIT_CACHE = max(32 * 1024 * 1024, (cap * 3) // 4)
    return _VMEM_LIMIT_CACHE


def _choose_batch_tile(batch, seq_len, hidden, num_layers, vmem_limit):
    """Largest batch tile (multiple of 8, <=128) whose resident weights +
    ~double-buffered activation tiles fit the VMEM budget."""
    H, L, S = hidden, num_layers, seq_len
    b8 = _round_up(batch, 8)
    resident = (2 * 3 * H * H * (2 + max(L - 1, 0) + L)   # bf16 GRU weights
                + 2 * H * H                               # bf16 attn weight
                + 4 * 2 * L * 3 * H)                      # f32 biases
    tb = 8
    for cand in (128, 64, 32, 16, 8):
        if cand > b8:
            continue
        per_tile = (2 * cand * S * H        # enc (bf16)
                    + 2 * 2 * cand * H      # emb + last_context (bf16)
                    + 4 * L * cand * H      # hidden in (f32)
                    + 4 * L * cand * H      # hidden out (f32)
                    + 4 * cand * H          # context out (f32)
                    + 4 * cand * S)         # attn out (f32)
        if resident + 3 * per_tile <= int(vmem_limit * 0.75):
            tb = cand
            break
    return min(tb, b8)


def _choose_v_tile(vocab, hidden, vmem_limit):
    """Largest vocab tile (multiple of 128, <=4096) fitting the VMEM budget."""
    H = hidden
    v128 = _round_up(vocab, 128)
    tv = 128
    for cand in (4096, 2048, 1024, 512, 256, 128):
        if cand > v128:
            continue
        per_tile = (2 * 2 * H * cand        # streamed W_out tile (bf16)
                    + 4 * cand              # bias tile (f32)
                    + 4 * 256 * cand)       # logits tile (f32, B_pad <= 256 assumed)
        if 3 * per_tile <= int(vmem_limit * 0.75):
            tv = cand
            break
    # Keep >= 2 vocab tiles when possible so the "parallel" vocab axis can be
    # split across both TensorCores on v7x.
    if v128 // tv < 2 and tv > 128:
        tv = max(128, tv // 2)
    return tv, _round_up(vocab, tv)


# --------------------------------------------------------------------------
# Kernel A: GRU (one time step, num_layers deep) + attention + context
# --------------------------------------------------------------------------
def _gru_attn_kernel(*refs, hidden_size, num_layers):
    H, L = hidden_size, num_layers
    f32, bf16 = jnp.float32, jnp.bfloat16

    emb_ref, ctx_ref, h0_ref, enc_ref, w_ih0_emb_ref, w_ih0_ctx_ref = refs[:6]
    if L > 1:
        w_ih_rest_ref = refs[6]
        k = 7
    else:
        k = 6
    w_hh_ref, b_ih_ref, b_hh_ref, w_attn_ref = refs[k:k + 4]
    h_out_ref, ctx_out_ref, attn_out_ref = refs[k + 4:k + 7]

    def gru_cell(gi, gh, h_prev):
        # PyTorch GRU gate order [r | z | n]; all gate math in f32.
        i_r, i_z, i_n = gi[:, :H], gi[:, H:2 * H], gi[:, 2 * H:]
        h_r, h_z, h_n = gh[:, :H], gh[:, H:2 * H], gh[:, 2 * H:]
        r = jax.nn.sigmoid(i_r + h_r)
        z = jax.nn.sigmoid(i_z + h_z)
        n = jnp.tanh(i_n + r * h_n)
        return (1.0 - z) * n + z * h_prev

    emb = emb_ref[...]           # (TB, H) bf16
    last_ctx = ctx_ref[...]      # (TB, H) bf16

    # ----- Layer 0: split matmuls (emb half + context half), no lane concat ---
    h_prev = h0_ref[0]           # (TB, H) f32
    gi = (jnp.dot(emb, w_ih0_emb_ref[...], preferred_element_type=f32)
          + jnp.dot(last_ctx, w_ih0_ctx_ref[...], preferred_element_type=f32)
          + b_ih_ref[0:1, :])
    gh = (jnp.dot(h_prev.astype(bf16), w_hh_ref[0], preferred_element_type=f32)
          + b_hh_ref[0:1, :])
    x = gru_cell(gi, gh, h_prev)
    h_out_ref[0, :, :] = x

    # ----- Layers > 0 ----------------------------------------------------------
    for l in range(1, L):                                   # static Python loop
        h_prev = h0_ref[l]
        gi = (jnp.dot(x.astype(bf16), w_ih_rest_ref[l - 1], preferred_element_type=f32)
              + b_ih_ref[l:l + 1, :])
        gh = (jnp.dot(h_prev.astype(bf16), w_hh_ref[l], preferred_element_type=f32)
              + b_hh_ref[l:l + 1, :])
        x = gru_cell(gi, gh, h_prev)
        h_out_ref[l, :, :] = x

    rnn_out = x                                             # (TB, H) f32

    # ----- Attention: project the QUERY once (linearity), score on the VPU -----
    # energy[b,s] = rnn_out[b] . (W_attn @ enc[b,s]) = (rnn_out[b] @ W_attn) . enc[b,s]
    # The attn-bias term rnn_out[b].b_attn is constant per row -> cancels in softmax.
    q = jnp.dot(rnn_out.astype(bf16), w_attn_ref[...], preferred_element_type=f32)

    enc = enc_ref[...].astype(f32)                          # (TB, S, H)
    energies = jnp.sum(q[:, None, :] * enc, axis=-1)        # (TB, S) VPU mul + lane reduce
    e_max = jnp.max(energies, axis=-1, keepdims=True)
    e_exp = jnp.exp(energies - e_max)
    denom = jnp.sum(e_exp, axis=-1, keepdims=True)
    attn = e_exp * pl.reciprocal(denom, approx=True)        # (TB, S)
    attn_out_ref[...] = attn

    # context[b] = attn[b] @ enc[b]  (VPU mul + sublane reduce)
    context = jnp.sum(attn[:, :, None] * enc, axis=1)       # (TB, H)
    ctx_out_ref[...] = context


# --------------------------------------------------------------------------
# Kernel B: output projection, streamed over the vocab dimension
# --------------------------------------------------------------------------
def _out_proj_kernel(rc_ref, w_ref, b_ref, logits_ref):
    # logits = [rnn_out | context] @ W_out^T + b  (single matmul per vocab tile)
    logits_ref[...] = (jnp.dot(rc_ref[...], w_ref[...],
                               preferred_element_type=jnp.float32)
                       + b_ref[...])


# --------------------------------------------------------------------------
# Parameters
# --------------------------------------------------------------------------
def init_params(key, hidden_size, output_size, num_layers):
    """Synthetic parameters in PyTorch layout (W_ih (3H,in), W_hh (3H,H), gates [r|z|n])."""
    H, V, L = hidden_size, output_size, num_layers
    ks = jax.random.split(key, 9)
    scale = 0.1
    embedding = scale * jax.random.normal(ks[0], (V, H), jnp.float32)
    w_ih = [scale * jax.random.normal(jax.random.fold_in(ks[1], l),
                                      (3 * H, 2 * H if l == 0 else H), jnp.float32)
            for l in range(L)]
    w_hh = scale * jax.random.normal(ks[2], (L, 3 * H, H), jnp.float32)
    b_ih = scale * jax.random.normal(ks[3], (L, 3 * H), jnp.float32)
    b_hh = scale * jax.random.normal(ks[4], (L, 3 * H), jnp.float32)
    w_attn = scale * jax.random.normal(ks[5], (H, H), jnp.float32)      # Linear(H, H)
    b_attn = scale * jax.random.normal(ks[6], (H,), jnp.float32)        # cancels in softmax
    w_out = scale * jax.random.normal(ks[7], (V, 2 * H), jnp.float32)   # Linear(2H, V)
    b_out = scale * jax.random.normal(ks[8], (V,), jnp.float32)
    return dict(embedding=embedding, w_ih=w_ih, w_hh=w_hh, b_ih=b_ih, b_hh=b_hh,
                w_attn=w_attn, b_attn=b_attn, w_out=w_out, b_out=b_out)


def preprocess_params(params, *, hidden_size, output_size, num_layers):
    """One-time transposes / splits / bf16 casts / V padding (OUTSIDE the decode loop)."""
    H, V, L = hidden_size, output_size, num_layers
    bf16, f32 = jnp.bfloat16, jnp.float32

    w_ih0_t = params['w_ih'][0].T                       # (2H, 3H)
    out = dict(
        embedding=params['embedding'].astype(f32),
        w_ih0_emb=w_ih0_t[:H, :].astype(bf16),          # (H, 3H)
        w_ih0_ctx=w_ih0_t[H:, :].astype(bf16),          # (H, 3H)
        w_hh=jnp.transpose(params['w_hh'], (0, 2, 1)).astype(bf16),   # (L, H, 3H)
        b_ih=params['b_ih'].astype(f32),
        b_hh=params['b_hh'].astype(f32),
        # Query-side attention weight: q = rnn_out @ W_attn (PyTorch (out,in) layout).
        # b_attn is dropped: it only shifts every energy of a row by the same
        # constant and cancels under the per-row softmax.
        w_attn=params['w_attn'].astype(bf16),           # (H, H)
    )
    if L > 1:
        out['w_ih_rest'] = jnp.stack(
            [params['w_ih'][l].T for l in range(1, L)]).astype(bf16)   # (L-1, H, 3H)

    tv, v_pad = _choose_v_tile(V, H, _vmem_limit_bytes())
    w_out_t = params['w_out'].T.astype(bf16)            # (2H, V)
    out['w_out'] = jnp.zeros((2 * H, v_pad), bf16).at[:, :V].set(w_out_t)
    out['b_out'] = jnp.zeros((1, v_pad), f32).at[:, :V].set(
        params['b_out'][None, :].astype(f32))
    return out


# --------------------------------------------------------------------------
# Forward pass (matches PyTorch Decoder.forward)
# --------------------------------------------------------------------------
@functools.partial(jax.jit, static_argnames=("hidden_size", "output_size", "num_layers"))
def decoder_forward(params, input_ids, last_context, hidden, encoder_outputs,
                    *, hidden_size, output_size, num_layers):
    H, V, L = hidden_size, output_size, num_layers
    B = input_ids.shape[0]
    S = encoder_outputs.shape[1]
    f32, bf16 = jnp.float32, jnp.bfloat16

    vmem_limit = _vmem_limit_bytes()
    TB = _choose_batch_tile(B, S, H, L, vmem_limit)
    B_pad = _round_up(B, TB)
    tv, v_pad = _choose_v_tile(V, H, vmem_limit)
    assert params['w_out'].shape[1] == v_pad, "preprocess_params / forward V padding mismatch"

    lrest = L - 1 if L > 1 else 0

    # Glue (plain JAX): embedding gather, bf16 activation casts, batch padding.
    # In a decode loop, cast encoder_outputs to bf16 once outside the loop.
    emb = params['embedding'][input_ids].astype(bf16)    # (B, H)
    ctx2d = last_context[0].astype(bf16)                 # (B, H)
    enc_bf = encoder_outputs.astype(bf16)                # (B, S, H)
    pad_b = B_pad - B
    if pad_b:
        emb = jnp.pad(emb, ((0, pad_b), (0, 0)))
        ctx2d = jnp.pad(ctx2d, ((0, pad_b), (0, 0)))
        hidden_p = jnp.pad(hidden, ((0, 0), (0, pad_b), (0, 0)))
        enc_bf = jnp.pad(enc_bf, ((0, pad_b), (0, 0), (0, 0)))
    else:
        hidden_p = hidden

    # ---------------- Kernel A: GRU + attention + context ----------------------
    kernel_a = functools.partial(_gru_attn_kernel, hidden_size=H, num_layers=L)

    in_specs = [
        pl.BlockSpec((TB, H), lambda i: (i, 0)),             # emb
        pl.BlockSpec((TB, H), lambda i: (i, 0)),             # last context
        pl.BlockSpec((L, TB, H), lambda i: (0, i, 0)),       # hidden (f32, aliased to out 0)
        pl.BlockSpec((TB, S, H), lambda i: (i, 0, 0)),       # encoder outputs (bf16)
        pl.BlockSpec((H, 3 * H), lambda i: (0, 0)),          # w_ih0_emb
        pl.BlockSpec((H, 3 * H), lambda i: (0, 0)),          # w_ih0_ctx
    ]
    args = [emb, ctx2d, hidden_p, enc_bf, params['w_ih0_emb'], params['w_ih0_ctx']]
    if L > 1:
        in_specs.append(pl.BlockSpec((lrest, H, 3 * H), lambda i: (0, 0, 0)))  # w_ih_rest
        args.append(params['w_ih_rest'])
    in_specs += [
        pl.BlockSpec((L, H, 3 * H), lambda i: (0, 0, 0)),    # w_hh
        pl.BlockSpec((L, 3 * H), lambda i: (0, 0)),          # b_ih
        pl.BlockSpec((L, 3 * H), lambda i: (0, 0)),          # b_hh
        pl.BlockSpec((H, H), lambda i: (0, 0)),              # w_attn
    ]
    args += [params['w_hh'], params['b_ih'], params['b_hh'], params['w_attn']]

    flops_a = int(2 * B_pad * 3 * H * H * (2 + lrest + L)    # GRU matmuls
                  + 2 * B_pad * H * H                        # attention query
                  + 4 * B_pad * S * H)                       # energies + context
    trans_a = int(B_pad * (3 * L * H + S + 1))
    bytes_a = int(2 * (emb.size + ctx2d.size + enc_bf.size)
                  + 4 * hidden_p.size
                  + 2 * (2 * H * 3 * H + lrest * H * 3 * H + L * H * 3 * H + H * H)
                  + 4 * (2 * L * 3 * H)
                  + 4 * (L * B_pad * H + B_pad * H + B_pad * S))

    new_hidden, context, attn = pl.pallas_call(
        kernel_a,
        grid=(B_pad // TB,),
        out_shape=(
            jax.ShapeDtypeStruct((L, B_pad, H), f32),        # new hidden (aliases input 2)
            jax.ShapeDtypeStruct((B_pad, H), f32),           # context
            jax.ShapeDtypeStruct((B_pad, S), f32),           # attention weights
        ),
        in_specs=in_specs,
        out_specs=(
            pl.BlockSpec((L, TB, H), lambda i: (0, i, 0)),
            pl.BlockSpec((TB, H), lambda i: (i, 0)),
            pl.BlockSpec((TB, S), lambda i: (i, 0)),
        ),
        input_output_aliases={2: 0},                         # hidden updated in place
        compiler_params=pltpu.CompilerParams(
            dimension_semantics=("parallel",),
            vmem_limit_bytes=vmem_limit),
        cost_estimate=pl.CostEstimate(flops=flops_a, transcendentals=trans_a,
                                      bytes_accessed=bytes_a),
    )(*args)

    # ---------------- Kernel B: output projection, streamed over V -------------
    # rnn_out == new_hidden[L-1]; concatenate with context and pre-cast to bf16
    # once here (instead of re-casting inside every vocab tile).
    rc_bf = jnp.concatenate([new_hidden[L - 1], context], axis=-1).astype(bf16)  # (B_pad, 2H)

    flops_b = int(2 * B_pad * 2 * H * v_pad)
    bytes_b = int(2 * (2 * H * v_pad) + 4 * v_pad + 2 * B_pad * 2 * H + 4 * B_pad * v_pad)

    logits_pad = pl.pallas_call(
        _out_proj_kernel,
        grid=(v_pad // tv,),
        out_shape=jax.ShapeDtypeStruct((B_pad, v_pad), f32),
        in_specs=[
            pl.BlockSpec((B_pad, 2 * H), lambda j: (0, 0)),  # [rnn_out | context] (resident)
            pl.BlockSpec((2 * H, tv), lambda j: (0, j)),     # W_out (streamed)
            pl.BlockSpec((1, tv), lambda j: (0, j)),         # b_out (streamed)
        ],
        out_specs=pl.BlockSpec((B_pad, tv), lambda j: (0, j)),
        compiler_params=pltpu.CompilerParams(
            dimension_semantics=("parallel",),
            vmem_limit_bytes=vmem_limit),
        cost_estimate=pl.CostEstimate(flops=flops_b, transcendentals=0,
                                      bytes_accessed=bytes_b),
    )(rc_bf, params['w_out'], params['b_out'])

    # Vocab softmax on the real (B, V) logits (kept in the wrapper for small
    # decode batches; fold into Kernel B only when B is large).
    output = jax.nn.softmax(logits_pad[:B, :V], axis=-1)

    # Match PyTorch return shapes: (B,V), (1,B,H), (L,B,H), (B,1,S)
    return (output,
            context[:B][None],
            new_hidden[:, :B, :],
            attn[:B][:, None, :])


if __name__ == "__main__":
    # Small deterministic configuration.
    B, H, S, V, L = 2, 32, 8, 16, 2   # batch, hidden, enc seq len, vocab, gru layers

    key = jax.random.PRNGKey(0)
    k_par, k_in, k_ctx, k_hid, k_enc = jax.random.split(key, 5)

    raw_params = init_params(k_par, hidden_size=H, output_size=V, num_layers=L)
    params = preprocess_params(raw_params, hidden_size=H, output_size=V, num_layers=L)

    input_ids = jax.random.randint(k_in, (B,), 0, V, dtype=jnp.int32)        # (B,)
    last_context = jax.random.normal(k_ctx, (1, B, H), jnp.float32)          # (1, B, H)
    hidden = jax.random.normal(k_hid, (L, B, H), jnp.float32)                # (L, B, H)
    encoder_outputs = jax.random.normal(k_enc, (B, S, H), jnp.float32)       # (B, S, H)

    output, context, new_hidden, attn_weights = decoder_forward(
        params, input_ids, last_context, hidden, encoder_outputs,
        hidden_size=H, output_size=V, num_layers=L)

    jax.block_until_ready((output, context, new_hidden, attn_weights))

    assert output.shape == (B, V)
    assert context.shape == (1, B, H)
    assert new_hidden.shape == (L, B, H)
    assert attn_weights.shape == (B, 1, S)
    assert bool(jnp.all(jnp.isfinite(output)))
    print("KERNEL_OK")
</pallas_src>

<mosaic_0001>
module attributes {stable_mosaic.version = 11 : i64} {
  func.func @_gru_attn_kernel(%arg0: i32, %arg1: memref<8x32xbf16, #tpu.memory_space<vmem>>, %arg2: memref<8x32xbf16, #tpu.memory_space<vmem>>, %arg3: memref<2x8x32xf32, #tpu.memory_space<vmem>>, %arg4: memref<8x8x32xbf16, #tpu.memory_space<vmem>>, %arg5: memref<32x96xbf16, #tpu.memory_space<vmem>>, %arg6: memref<32x96xbf16, #tpu.memory_space<vmem>>, %arg7: memref<1x32x96xbf16, #tpu.memory_space<vmem>>, %arg8: memref<2x32x96xbf16, #tpu.memory_space<vmem>>, %arg9: memref<2x96xf32, #tpu.memory_space<vmem>>, %arg10: memref<2x96xf32, #tpu.memory_space<vmem>>, %arg11: memref<32x32xbf16, #tpu.memory_space<vmem>>, %arg12: memref<2x8x32xf32, #tpu.memory_space<vmem>>, %arg13: memref<8x32xf32, #tpu.memory_space<vmem>>, %arg14: memref<8x8xf32, #tpu.memory_space<vmem>>) attributes {dimension_semantics = [#tpu.dimension_semantics<parallel>], iteration_bounds = array<i64: 1>, scalar_prefetch = 0 : i64, scratch_operands = 0 : i64, tpu.core_type = #tpu.core_type<tc>, window_params = [{transform_indices = @transform_0, window_bounds = array<i64: 8, 32>}, {transform_indices = @transform_1, window_bounds = array<i64: 8, 32>}, {transform_indices = @transform_2, window_bounds = array<i64: 2, 8, 32>}, {transform_indices = @transform_3, window_bounds = array<i64: 8, 8, 32>}, {pipeline_mode = #tpu.pipeline_mode<synchronous>, transform_indices = @transform_4, window_bounds = array<i64: 32, 96>}, {pipeline_mode = #tpu.pipeline_mode<synchronous>, transform_indices = @transform_5, window_bounds = array<i64: 32, 96>}, {pipeline_mode = #tpu.pipeline_mode<synchronous>, transform_indices = @transform_6, window_bounds = array<i64: 1, 32, 96>}, {pipeline_mode = #tpu.pipeline_mode<synchronous>, transform_indices = @transform_7, window_bounds = array<i64: 2, 32, 96>}, {pipeline_mode = #tpu.pipeline_mode<synchronous>, transform_indices = @transform_8, window_bounds = array<i64: 2, 96>}, {pipeline_mode = #tpu.pipeline_mode<synchronous>, transform_indices = @transform_9, window_bounds = array<i64: 2, 96>}, {pipeline_mode = #tpu.pipeline_mode<synchronous>, transform_indices = @transform_10, window_bounds = array<i64: 32, 32>}, {transform_indices = @transform_11, window_bounds = array<i64: 2, 8, 32>}, {transform_indices = @transform_12, window_bounds = array<i64: 8, 32>}, {transform_indices = @transform_13, window_bounds = array<i64: 8, 8>}]} {
    %c0 = arith.constant 0 : index
    %c0_0 = arith.constant 0 : index
    %0 = vector.load %arg1[%c0, %c0_0] : memref<8x32xbf16, #tpu.memory_space<vmem>>, vector<8x32xbf16>
    %c0_1 = arith.constant 0 : index
    %c0_2 = arith.constant 0 : index
    %1 = vector.load %arg2[%c0_1, %c0_2] : memref<8x32xbf16, #tpu.memory_space<vmem>>, vector<8x32xbf16>
    %c0_3 = arith.constant 0 : index
    %c0_4 = arith.constant 0 : index
    %c0_5 = arith.constant 0 : index
    %2 = vector.load %arg3[%c0_3, %c0_4, %c0_5] : memref<2x8x32xf32, #tpu.memory_space<vmem>>, vector<1x8x32xf32>
    %3 = vector.shape_cast %2 : vector<1x8x32xf32> to vector<8x32xf32>
    %c0_6 = arith.constant 0 : index
    %c0_7 = arith.constant 0 : index
    %4 = vector.load %arg5[%c0_6, %c0_7] : memref<32x96xbf16, #tpu.memory_space<vmem>>, vector<32x96xbf16>
    %cst = arith.constant dense<0.000000e+00> : vector<8x96xf32>
    %5 = tpu.matmul %0, %4, %cst {dimension_numbers = #tpu.dot_dimension_numbers<[1], [0], [0], [1], [0, 0, 1, 1], [], []>} : vector<8x32xbf16>, vector<32x96xbf16>, vector<8x96xf32> -> vector<8x96xf32>
    %c0_8 = arith.constant 0 : index
    %c0_9 = arith.constant 0 : index
    %6 = vector.load %arg6[%c0_8, %c0_9] : memref<32x96xbf16, #tpu.memory_space<vmem>>, vector<32x96xbf16>
    %cst_10 = arith.constant dense<0.000000e+00> : vector<8x96xf32>
    %7 = tpu.matmul %1, %6, %cst_10 {dimension_numbers = #tpu.dot_dimension_numbers<[1], [0], [0], [1], [0, 0, 1, 1], [], []>} : vector<8x32xbf16>, vector<32x96xbf16>, vector<8x96xf32> -> vector<8x96xf32>
    %8 = arith.addf %5, %7 : vector<8x96xf32>
    %c0_11 = arith.constant 0 : index
    %c0_12 = arith.constant 0 : index
    %9 = vector.load %arg9[%c0_11, %c0_12] : memref<2x96xf32, #tpu.memory_space<vmem>>, vector<1x96xf32>
    %10 = vector.broadcast %9 : vector<1x96xf32> to vector<8x96xf32>
    %11 = arith.addf %8, %10 : vector<8x96xf32>
    %12 = arith.truncf %3 : vector<8x32xf32> to vector<8x32xbf16>
    %c0_13 = arith.constant 0 : index
    %c0_14 = arith.constant 0 : index
    %c0_15 = arith.constant 0 : index
    %13 = vector.load %arg8[%c0_13, %c0_14, %c0_15] : memref<2x32x96xbf16, #tpu.memory_space<vmem>>, vector<1x32x96xbf16>
    %14 = vector.shape_cast %13 : vector<1x32x96xbf16> to vector<32x96xbf16>
    %cst_16 = arith.constant dense<0.000000e+00> : vector<8x96xf32>
    %15 = tpu.matmul %12, %14, %cst_16 {dimension_numbers = #tpu.dot_dimension_numbers<[1], [0], [0], [1], [0, 0, 1, 1], [], []>} : vector<8x32xbf16>, vector<32x96xbf16>, vector<8x96xf32> -> vector<8x96xf32>
    %c0_17 = arith.constant 0 : index
    %c0_18 = arith.constant 0 : index
    %16 = vector.load %arg10[%c0_17, %c0_18] : memref<2x96xf32, #tpu.memory_space<vmem>>, vector<1x96xf32>
    %17 = vector.broadcast %16 : vector<1x96xf32> to vector<8x96xf32>
    %18 = arith.addf %15, %17 : vector<8x96xf32>
    %19 = vector.extract_strided_slice %11 {offsets = [0, 0], sizes = [8, 32], strides = [1, 1]} : vector<8x96xf32> to vector<8x32xf32>
    %20 = vector.extract_strided_slice %11 {offsets = [0, 32], sizes = [8, 32], strides = [1, 1]} : vector<8x96xf32> to vector<8x32xf32>
    %21 = vector.extract_strided_slice %11 {offsets = [0, 64], sizes = [8, 32], strides = [1, 1]} : vector<8x96xf32> to vector<8x32xf32>
    %22 = vector.extract_strided_slice %18 {offsets = [0, 0], sizes = [8, 32], strides = [1, 1]} : vector<8x96xf32> to vector<8x32xf32>
    %23 = vector.extract_strided_slice %18 {offsets = [0, 32], sizes = [8, 32], strides = [1, 1]} : vector<8x96xf32> to vector<8x32xf32>
    %24 = vector.extract_strided_slice %18 {offsets = [0, 64], sizes = [8, 32], strides = [1, 1]} : vector<8x96xf32> to vector<8x32xf32>
    %25 = arith.addf %19, %22 : vector<8x32xf32>
    %26 = arith.negf %25 : vector<8x32xf32>
    %27 = math.exp %26 : vector<8x32xf32>
    %cst_19 = arith.constant 1.000000e+00 : f32
    %28 = vector.broadcast %cst_19 : f32 to vector<8x32xf32>
    %29 = arith.addf %28, %27 : vector<8x32xf32>
    %30 = arith.divf %28, %29 : vector<8x32xf32>
    %31 = arith.addf %20, %23 : vector<8x32xf32>
    %32 = arith.negf %31 : vector<8x32xf32>
    %33 = math.exp %32 : vector<8x32xf32>
    %cst_20 = arith.constant 1.000000e+00 : f32
    %34 = vector.broadcast %cst_20 : f32 to vector<8x32xf32>
    %35 = arith.addf %34, %33 : vector<8x32xf32>
    %36 = arith.divf %34, %35 : vector<8x32xf32>
    %37 = arith.mulf %30, %24 : vector<8x32xf32>
    %38 = arith.addf %21, %37 : vector<8x32xf32>
    %39 = math.tanh %38 : vector<8x32xf32>
    %cst_21 = arith.constant 1.000000e+00 : f32
    %40 = vector.broadcast %cst_21 : f32 to vector<8x32xf32>
    %41 = arith.subf %40, %36 : vector<8x32xf32>
    %42 = arith.mulf %41, %39 : vector<8x32xf32>
    %43 = arith.mulf %36, %3 : vector<8x32xf32>
    %44 = arith.addf %42, %43 : vector<8x32xf32>
    %c0_22 = arith.constant 0 : index
    %c0_23 = arith.constant 0 : index
    %c0_24 = arith.constant 0 : index
    %45 = vector.load %arg12[%c0_22, %c0_23, %c0_24] : memref<2x8x32xf32, #tpu.memory_space<vmem>>, vector<1x8x32xf32>
    %46 = vector.shape_cast %45 : vector<1x8x32xf32> to vector<8x32xf32>
    %47 = vector.shape_cast %44 : vector<8x32xf32> to vector<1x8x32xf32>
    tpu.vector_store %arg12[%c0_22, %c0_23, %c0_24], %47 {strides = array<i32>} : memref<2x8x32xf32, #tpu.memory_space<vmem>>, vector<1x8x32xf32>,
    %c1 = arith.constant 1 : index
    %c0_25 = arith.constant 0 : index
    %c0_26 = arith.constant 0 : index
    %48 = vector.load %arg3[%c1, %c0_25, %c0_26] : memref<2x8x32xf32, #tpu.memory_space<vmem>>, vector<1x8x32xf32>
    %49 = vector.shape_cast %48 : vector<1x8x32xf32> to vector<8x32xf32>
    %50 = arith.truncf %44 : vector<8x32xf32> to vector<8x32xbf16>
    %c0_27 = arith.constant 0 : index
    %c0_28 = arith.constant 0 : index
    %c0_29 = arith.constant 0 : index
    %51 = vector.load %arg7[%c0_27, %c0_28, %c0_29] : memref<1x32x96xbf16, #tpu.memory_space<vmem>>, vector<1x32x96xbf16>
    %52 = vector.shape_cast %51 : vector<1x32x96xbf16> to vector<32x96xbf16>
    %cst_30 = arith.constant dense<0.000000e+00> : vector<8x96xf32>
    %53 = tpu.matmul %50, %52, %cst_30 {dimension_numbers = #tpu.dot_dimension_numbers<[1], [0], [0], [1], [0, 0, 1, 1], [], []>} : vector<8x32xbf16>, vector<32x96xbf16>, vector<8x96xf32> -> vector<8x96xf32>
    %c1_31 = arith.constant 1 : index
    %c0_32 = arith.constant 0 : index
    %54 = vector.load %arg9[%c1_31, %c0_32] : memref<2x96xf32, #tpu.memory_space<vmem>>, vector<1x96xf32>
    %55 = vector.broadcast %54 : vector<1x96xf32> to vector<8x96xf32>
    %56 = arith.addf %53, %55 : vector<8x96xf32>
    %57 = arith.truncf %49 : vector<8x32xf32> to vector<8x32xbf16>
    %c1_33 = arith.constant 1 : index
    %c0_34 = arith.constant 0 : index
    %c0_35 = arith.constant 0 : index
    %58 = vector.load %arg8[%c1_33, %c0_34, %c0_35] : memref<2x32x96xbf16, #tpu.memory_space<vmem>>, vector<1x32x96xbf16>
    %59 = vector.shape_cast %58 : vector<1x32x96xbf16> to vector<32x96xbf16>
    %cst_36 = arith.constant dense<0.000000e+00> : vector<8x96xf32>
    %60 = tpu.matmul %57, %59, %cst_36 {dimension_numbers = #tpu.dot_dimension_numbers<[1], [0], [0], [1], [0, 0, 1, 1], [], []>} : vector<8x32xbf16>, vector<32x96xbf16>, vector<8x96xf32> -> vector<8x96xf32>
    %c1_37 = arith.constant 1 : index
    %c0_38 = arith.constant 0 : index
    %61 = vector.load %arg10[%c1_37, %c0_38] : memref<2x96xf32, #tpu.memory_space<vmem>>, vector<1x96xf32>
    %62 = vector.broadcast %61 : vector<1x96xf32> to vector<8x96xf32>
    %63 = arith.addf %60, %62 : vector<8x96xf32>
    %64 = vector.extract_strided_slice %56 {offsets = [0, 0], sizes = [8, 32], strides = [1, 1]} : vector<8x96xf32> to vector<8x32xf32>
    %65 = vector.extract_strided_slice %56 {offsets = [0, 32], sizes = [8, 32], strides = [1, 1]} : vector<8x96xf32> to vector<8x32xf32>
    %66 = vector.extract_strided_slice %56 {offsets = [0, 64], sizes = [8, 32], strides = [1, 1]} : vector<8x96xf32> to vector<8x32xf32>
    %67 = vector.extract_strided_slice %63 {offsets = [0, 0], sizes = [8, 32], strides = [1, 1]} : vector<8x96xf32> to vector<8x32xf32>
    %68 = vector.extract_strided_slice %63 {offsets = [0, 32], sizes = [8, 32], strides = [1, 1]} : vector<8x96xf32> to vector<8x32xf32>
    %69 = vector.extract_strided_slice %63 {offsets = [0, 64], sizes = [8, 32], strides = [1, 1]} : vector<8x96xf32> to vector<8x32xf32>
    %70 = arith.addf %64, %67 : vector<8x32xf32>
    %71 = arith.negf %70 : vector<8x32xf32>
    %72 = math.exp %71 : vector<8x32xf32>
    %cst_39 = arith.constant 1.000000e+00 : f32
    %73 = vector.broadcast %cst_39 : f32 to vector<8x32xf32>
    %74 = arith.addf %73, %72 : vector<8x32xf32>
    %75 = arith.divf %73, %74 : vector<8x32xf32>
    %76 = arith.addf %65, %68 : vector<8x32xf32>
    %77 = arith.negf %76 : vector<8x32xf32>
    %78 = math.exp %77 : vector<8x32xf32>
    %cst_40 = arith.constant 1.000000e+00 : f32
    %79 = vector.broadcast %cst_40 : f32 to vector<8x32xf32>
    %80 = arith.addf %79, %78 : vector<8x32xf32>
    %81 = arith.divf %79, %80 : vector<8x32xf32>
    %82 = arith.mulf %75, %69 : vector<8x32xf32>
    %83 = arith.addf %66, %82 : vector<8x32xf32>
    %84 = math.tanh %83 : vector<8x32xf32>
    %cst_41 = arith.constant 1.000000e+00 : f32
    %85 = vector.broadcast %cst_41 : f32 to vector<8x32xf32>
    %86 = arith.subf %85, %81 : vector<8x32xf32>
    %87 = arith.mulf %86, %84 : vector<8x32xf32>
    %88 = arith.mulf %81, %49 : vector<8x32xf32>
    %89 = arith.addf %87, %88 : vector<8x32xf32>
    %c1_42 = arith.constant 1 : index
    %c0_43 = arith.constant 0 : index
    %c0_44 = arith.constant 0 : index
    %90 = vector.load %arg12[%c1_42, %c0_43, %c0_44] : memref<2x8x32xf32, #tpu.memory_space<vmem>>, vector<1x8x32xf32>
    %91 = vector.shape_cast %90 : vector<1x8x32xf32> to vector<8x32xf32>
    %92 = vector.shape_cast %89 : vector<8x32xf32> to vector<1x8x32xf32>
    tpu.vector_store %arg12[%c1_42, %c0_43, %c0_44], %92 {strides = array<i32>} : memref<2x8x32xf32, #tpu.memory_space<vmem>>, vector<1x8x32xf32>,
    %93 = arith.truncf %89 : vector<8x32xf32> to vector<8x32xbf16>
    %c0_45 = arith.constant 0 : index
    %c0_46 = arith.constant 0 : index
    %94 = vector.load %arg11[%c0_45, %c0_46] : memref<32x32xbf16, #tpu.memory_space<vmem>>, vector<32x32xbf16>
    %cst_47 = arith.constant dense<0.000000e+00> : vector<8x32xf32>
    %95 = tpu.matmul %93, %94, %cst_47 {dimension_numbers = #tpu.dot_dimension_numbers<[1], [0], [0], [1], [0, 0, 1, 1], [], []>} : vector<8x32xbf16>, vector<32x32xbf16>, vector<8x32xf32> -> vector<8x32xf32>
    %c0_48 = arith.constant 0 : index
    %c0_49 = arith.constant 0 : index
    %c0_50 = arith.constant 0 : index
    %96 = vector.load %arg4[%c0_48, %c0_49, %c0_50] : memref<8x8x32xbf16, #tpu.memory_space<vmem>>, vector<8x8x32xbf16>
    %97 = arith.extf %96 : vector<8x8x32xbf16> to vector<8x8x32xf32>
    %98 = vector.shape_cast %95 : vector<8x32xf32> to vector<8x1x32xf32>
    %99 = vector.broadcast %98 : vector<8x1x32xf32> to vector<8x8x32xf32>
    %100 = arith.mulf %99, %97 : vector<8x8x32xf32>
    %cst_51 = arith.constant dense<0.000000e+00> : vector<8x8xf32>
    %101 = vector.multi_reduction <add>, %100, %cst_51 [2] : vector<8x8x32xf32> to vector<8x8xf32>
    %cst_52 = arith.constant dense<0xFF800000> : vector<8xf32>
    %102 = vector.multi_reduction <maximumf>, %101, %cst_52 [1] : vector<8x8xf32> to vector<8xf32>
    %103 = vector.shape_cast %102 : vector<8xf32> to vector<8x1xf32>
    %104 = vector.broadcast %103 : vector<8x1xf32> to vector<8x8xf32>
    %105 = arith.subf %101, %104 : vector<8x8xf32>
    %106 = math.exp %105 : vector<8x8xf32>
    %cst_53 = arith.constant dense<0.000000e+00> : vector<8xf32>
    %107 = vector.multi_reduction <add>, %106, %cst_53 [1] : vector<8x8xf32> to vector<8xf32>
    %108 = vector.shape_cast %107 : vector<8xf32> to vector<8x1xf32>
    %109 = tpu.reciprocal %108 {approx = true} : vector<8x1xf32> -> vector<8x1xf32>
    %110 = vector.broadcast %109 : vector<8x1xf32> to vector<8x8xf32>
    %111 = arith.mulf %106, %110 : vector<8x8xf32>
    %c0_54 = arith.constant 0 : index
    %c0_55 = arith.constant 0 : index
    %112 = vector.load %arg14[%c0_54, %c0_55] : memref<8x8xf32, #tpu.memory_space<vmem>>, vector<8x8xf32>
    tpu.vector_store %arg14[%c0_54, %c0_55], %111 {strides = array<i32>} : memref<8x8xf32, #tpu.memory_space<vmem>>, vector<8x8xf32>,
    %113 = vector.shape_cast %111 : vector<8x8xf32> to vector<8x8x1xf32>
    %114 = vector.broadcast %113 : vector<8x8x1xf32> to vector<8x8x32xf32>
    %115 = arith.mulf %114, %97 : vector<8x8x32xf32>
    %cst_56 = arith.constant dense<0.000000e+00> : vector<8x32xf32>
    %116 = vector.multi_reduction <add>, %115, %cst_56 [1] : vector<8x8x32xf32> to vector<8x32xf32>
    %c0_57 = arith.constant 0 : index
    %c0_58 = arith.constant 0 : index
    %117 = vector.load %arg13[%c0_57, %c0_58] : memref<8x32xf32, #tpu.memory_space<vmem>>, vector<8x32xf32>
    tpu.vector_store %arg13[%c0_57, %c0_58], %116 {strides = array<i32>} : memref<8x32xf32, #tpu.memory_space<vmem>>, vector<8x32xf32>,
    return
  }
  func.func @transform_0(%arg0: i32) -> (i32, i32) {
    %c0_i32 = arith.constant 0 : i32
    %c0_i32_0 = arith.constant 0 : i32
    return %arg0, %c0_i32 : i32, i32
  }
  func.func @transform_1(%arg0: i32) -> (i32, i32) {
    %c0_i32 = arith.constant 0 : i32
    %c0_i32_0 = arith.constant 0 : i32
    return %arg0, %c0_i32 : i32, i32
  }
  func.func @transform_2(%arg0: i32) -> (i32, i32, i32) {
    %c0_i32 = arith.constant 0 : i32
    %c0_i32_0 = arith.constant 0 : i32
    %c0_i32_1 = arith.constant 0 : i32
    return %c0_i32, %arg0, %c0_i32_0 : i32, i32, i32
  }
  func.func @transform_3(%arg0: i32) -> (i32, i32, i32) {
    %c0_i32 = arith.constant 0 : i32
    %c0_i32_0 = arith.constant 0 : i32
    %c0_i32_1 = arith.constant 0 : i32
    return %arg0, %c0_i32, %c0_i32_0 : i32, i32, i32
  }
  func.func @transform_4(%arg0: i32) -> (i32, i32) {
    %c0_i32 = arith.constant 0 : i32
    %c0_i32_0 = arith.constant 0 : i32
    %c0_i32_1 = arith.constant 0 : i32
    return %c0_i32, %c0_i32_0 : i32, i32
  }
  func.func @transform_5(%arg0: i32) -> (i32, i32) {
    %c0_i32 = arith.constant 0 : i32
    %c0_i32_0 = arith.constant 0 : i32
    %c0_i32_1 = arith.constant 0 : i32
    return %c0_i32, %c0_i32_0 : i32, i32
  }
  func.func @transform_6(%arg0: i32) -> (i32, i32, i32) {
    %c0_i32 = arith.constant 0 : i32
    %c0_i32_0 = arith.constant 0 : i32
    %c0_i32_1 = arith.constant 0 : i32
    %c0_i32_2 = arith.constant 0 : i32
    return %c0_i32, %c0_i32_0, %c0_i32_1 : i32, i32, i32
  }
  func.func @transform_7(%arg0: i32) -> (i32, i32, i32) {
    %c0_i32 = arith.constant 0 : i32
    %c0_i32_0 = arith.constant 0 : i32
    %c0_i32_1 = arith.constant 0 : i32
    %c0_i32_2 = arith.constant 0 : i32
    return %c0_i32, %c0_i32_0, %c0_i32_1 : i32, i32, i32
  }
  func.func @transform_8(%arg0: i32) -> (i32, i32) {
    %c0_i32 = arith.constant 0 : i32
    %c0_i32_0 = arith.constant 0 : i32
    %c0_i32_1 = arith.constant 0 : i32
    return %c0_i32, %c0_i32_0 : i32, i32
  }
  func.func @transform_9(%arg0: i32) -> (i32, i32) {
    %c0_i32 = arith.constant 0 : i32
    %c0_i32_0 = arith.constant 0 : i32
    %c0_i32_1 = arith.constant 0 : i32
    return %c0_i32, %c0_i32_0 : i32, i32
  }
  func.func @transform_10(%arg0: i32) -> (i32, i32) {
    %c0_i32 = arith.constant 0 : i32
    %c0_i32_0 = arith.constant 0 : i32
    %c0_i32_1 = arith.constant 0 : i32
    return %c0_i32, %c0_i32_0 : i32, i32
  }
  func.func @transform_11(%arg0: i32) -> (i32, i32, i32) {
    %c0_i32 = arith.constant 0 : i32
    %c0_i32_0 = arith.constant 0 : i32
    %c0_i32_1 = arith.constant 0 : i32
    return %c0_i32, %arg0, %c0_i32_0 : i32, i32, i32
  }
  func.func @transform_12(%arg0: i32) -> (i32, i32) {
    %c0_i32 = arith.constant 0 : i32
    %c0_i32_0 = arith.constant 0 : i32
    return %arg0, %c0_i32 : i32, i32
  }
  func.func @transform_13(%arg0: i32) -> (i32, i32) {
    %c0_i32 = arith.constant 0 : i32
    %c0_i32_0 = arith.constant 0 : i32
    return %arg0, %c0_i32 : i32, i32
  }
}

module attributes {stable_mosaic.version = 11 : i64} {
  func.func @_out_proj_kernel(%arg0: i32, %arg1: memref<8x64xbf16, #tpu.memory_space<vmem>>, %arg2: memref<64x128xbf16, #tpu.memory_space<vmem>>, %arg3: memref<1x128xf32, #tpu.memory_space<vmem>>, %arg4: memref<8x128xf32, #tpu.memory_space<vmem>>) attributes {dimension_semantics = [#tpu.dimension_semantics<parallel>], iteration_bounds = array<i64: 1>, scalar_prefetch = 0 : i64, scratch_operands = 0 : i64, tpu.core_type = #tpu.core_type<tc>, window_params = [{pipeline_mode = #tpu.pipeline_mode<synchronous>, transform_indices = @transform_0, window_bounds = array<i64: 8, 64>}, {transform_indices = @transform_1, window_bounds = array<i64: 64, 128>}, {transform_indices = @transform_2, window_bounds = array<i64: 1, 128>}, {transform_indices = @transform_3, window_bounds = array<i64: 8, 128>}]} {
    %c0 = arith.constant 0 : index
    %c0_0 = arith.constant 0 : index
    %0 = vector.load %arg1[%c0, %c0_0] : memref<8x64xbf16, #tpu.memory_space<vmem>>, vector<8x64xbf16>
    %c0_1 = arith.constant 0 : index
    %c0_2 = arith.constant 0 : index
    %1 = vector.load %arg2[%c0_1, %c0_2] : memref<64x128xbf16, #tpu.memory_space<vmem>>, vector<64x128xbf16>
    %cst = arith.constant dense<0.000000e+00> : vector<8x128xf32>
    %2 = tpu.matmul %0, %1, %cst {dimension_numbers = #tpu.dot_dimension_numbers<[1], [0], [0], [1], [0, 0, 1, 1], [], []>} : vector<8x64xbf16>, vector<64x128xbf16>, vector<8x128xf32> -> vector<8x128xf32>
    %c0_3 = arith.constant 0 : index
    %c0_4 = arith.constant 0 : index
    %3 = vector.load %arg3[%c0_3, %c0_4] : memref<1x128xf32, #tpu.memory_space<vmem>>, vector<1x128xf32>
    %4 = vector.broadcast %3 : vector<1x128xf32> to vector<8x128xf32>
    %5 = arith.addf %2, %4 : vector<8x128xf32>
    %c0_5 = arith.constant 0 : index
    %c0_6 = arith.constant 0 : index
    %6 = vector.load %arg4[%c0_5, %c0_6] : memref<8x128xf32, #tpu.memory_space<vmem>>, vector<8x128xf32>
    tpu.vector_store %arg4[%c0_5, %c0_6], %5 {strides = array<i32>} : memref<8x128xf32, #tpu.memory_space<vmem>>, vector<8x128xf32>,
    return
  }
  func.func @transform_0(%arg0: i32) -> (i32, i32) {
    %c0_i32 = arith.constant 0 : i32
    %c0_i32_0 = arith.constant 0 : i32
    %c0_i32_1 = arith.constant 0 : i32
    return %c0_i32, %c0_i32_0 : i32, i32
  }
  func.func @transform_1(%arg0: i32) -> (i32, i32) {
    %c0_i32 = arith.constant 0 : i32
    %c0_i32_0 = arith.constant 0 : i32
    return %c0_i32, %arg0 : i32, i32
  }
  func.func @transform_2(%arg0: i32) -> (i32, i32) {
    %c0_i32 = arith.constant 0 : i32
    %c0_i32_0 = arith.constant 0 : i32
    return %c0_i32, %arg0 : i32, i32
  }
  func.func @transform_3(%arg0: i32) -> (i32, i32) {
    %c0_i32 = arith.constant 0 : i32
    %c0_i32_0 = arith.constant 0 : i32
    return %c0_i32, %arg0 : i32, i32
  }
}

</mosaic_0001>

<llo_original>
// kernel: decoder_forward.3
$region0: #{decoder_forward.3}
  #allocation0 [shape = 'u32[]', space=smem, size = 0x4, offset = 0x4, fixed_abs, tag = 'smem constant byte address 0x4 - core index']
  #allocation1 [shape = 'u32[72,128]{1,0:T(1,128)}', space=vmem, size = 0x9000, scoped, tag = 'internal scratch']
  %s0 = inlined_call_operand.vmem [shape: bf16[8,64], index: 0, kind: input, shape index: {}]
  %s1 = inlined_call_operand.vmem [shape: bf16[64,128], index: 1, kind: input, shape index: {}]
  %s2 = inlined_call_operand.vmem [shape: f32[1,128], index: 2, kind: input, shape index: {}]
  %s3 = inlined_call_operand.vmem [shape: f32[8,128], index: 3, kind: output, shape index: {}]
  %s4 = sld [smem:[#allocation0]]
  $region22: #{decoder_forward.3} parent=0
    _
  %s6 = ssub.s32 1, %s4
  %s7 = scalar_select 0, %s6, %s4
  // Predicated region
  $region2: #{decoder_forward.3} parent=0 // pred_check
    _
  $region3: #{decoder_forward.3} parent=0 // pred_check_branch
    %9 = sbr.rel (0) target = $region5
  $region4: #{decoder_forward.3} parent=0 // pred_region
    _
  $region5: #{decoder_forward.3} parent=0 // pred_fallthru
    _
  // Predicated region
  $region6: #{decoder_forward.3} parent=0 // pred_check
    _
  $region7: #{decoder_forward.3} parent=0 // pred_check_branch
    %11 = sbr.rel (0) target = $region9
  $region8: #{decoder_forward.3} parent=0 // pred_region
    _
  $region9: #{decoder_forward.3} parent=0 // pred_fallthru
    _
  // Predicated region
  $region10: #{decoder_forward.3} parent=0 // pred_check
    _
  $region11: #{decoder_forward.3} parent=0 // pred_check_branch
    %13 = sbr.rel (0) target = $region13
  $region12: #{decoder_forward.3} parent=0 // pred_region
    _
  $region13: #{decoder_forward.3} parent=0 // pred_fallthru
    _
  %v15 = vld [vmem:[%s0] sm:$0xf]
  %v16 = vld [vmem:[%s1] sm:$0xf]
  %v17 = vld [vmem:[%s1 + $0x4] sm:$0xf]
  %v18 = vld [vmem:[%s1 + $0x8] sm:$0xf]
  %v19 = vld [vmem:[%s1 + $0xc] sm:$0xf]
  %v20 = vld [vmem:[%s1 + $0x10] sm:$0xf]
  %v21 = vld [vmem:[%s1 + $0x14] sm:$0xf]
  %v22 = vld [vmem:[%s1 + $0x18] sm:$0xf]
  %v23 = vld [vmem:[%s1 + $0x1c] sm:$0xf]
  %v24 = vld [vmem:[%s2] sm:$0x1]
  %v26 = vperm.slane %v24, 0
  %v36 = vunpack.c.l.b16 %v16
  %v37 = vunpack.c.l.b16 %v17
  %v38 = vunpack.c.l.b16 %v18
  %v39 = vunpack.c.l.b16 %v19
  %v40 = vunpack.c.l.b16 %v20
  %v41 = vunpack.c.l.b16 %v21
  %v42 = vunpack.c.l.b16 %v22
  %v43 = vunpack.c.l.b16 %v23
  %v44 = vpack.c.b16 %v37, %v36
  %v45 = vpack.c.b16 %v39, %v38
  %v46 = vpack.c.b16 %v41, %v40
  %v47 = vpack.c.b16 %v43, %v42
  %vm52 = vcmask 523264
  %v54 = vsel %vm52, %v15, 0
  %56 = vmatpush.bf16.msra.mxu0 0
  %57 = vmatpush.bf16.msra.mxu0 0
  %58 = vmatpush.bf16.msra.mxu0 0
  %59 = vmatpush.bf16.msra.mxu0 0
  %60 = vmatpush.bf16.msra.mxu0 %v47
  %61 = vmatpush.bf16.msra.mxu0 %v46
  %62 = vmatpush.bf16.msra.mxu0 %v45
  %63 = vmatpush.bf16.msra.mxu0 %v44
  %64 = vmatmul.bf16.gmra.mxu0 %v54
  %v65 = vpop.f32.mrf.mxu0
  %v66 = vadd.f32 %v26, %v65
  %v67 = vpop.f32.mrf.mxu0
  %68 = vdwg.mxu0
  %69 = vst [vmem:[%s3] sm:$0xff] %v66
  // Predicated region
  $region14: #{decoder_forward.3} parent=0 // pred_check
    _
  $region15: #{decoder_forward.3} parent=0 // pred_check_branch
    %71 = sbr.rel (0) target = $region17
  $region16: #{decoder_forward.3} parent=0 // pred_region
    _
  $region17: #{decoder_forward.3} parent=0 // pred_fallthru
    _
  // Predicated region
  $region18: #{decoder_forward.3} parent=0 // pred_check
    _
  $region19: #{decoder_forward.3} parent=0 // pred_check_branch
    %73 = sbr.rel (0) target = $region21
  $region20: #{decoder_forward.3} parent=0 // pred_region
    _
  $region21: #{decoder_forward.3} parent=0 // pred_fallthru
    _

// kernel: decoder_forward.2
$region0: #{decoder_forward.2}
  #allocation0 [shape = 'u32[]', space=smem, size = 0x4, offset = 0x4, fixed_abs, tag = 'smem constant byte address 0x4 - core index']
  #allocation1 [shape = 'u32[72,128]{1,0:T(1,128)}', space=vmem, size = 0x9000, scoped, tag = 'internal scratch']
  %s0 = inlined_call_operand.vmem [shape: bf16[8,32], index: 0, kind: input, shape index: {}]
  %s1 = inlined_call_operand.vmem [shape: bf16[8,32], index: 1, kind: input, shape index: {}]
  %s2 = inlined_call_operand.vmem [shape: f32[2,8,32], index: 2, kind: input, shape index: {}, may-alias: {2,11}]
  %s3 = inlined_call_operand.vmem [shape: bf16[8,8,32], index: 3, kind: input, shape index: {}]
  %s4 = inlined_call_operand.vmem [shape: bf16[32,96], index: 4, kind: input, shape index: {}]
  %s5 = inlined_call_operand.vmem [shape: bf16[32,96], index: 5, kind: input, shape index: {}]
  %s6 = inlined_call_operand.vmem [shape: bf16[1,32,96], index: 6, kind: input, shape index: {}]
  %s7 = inlined_call_operand.vmem [shape: bf16[2,32,96], index: 7, kind: input, shape index: {}]
  %s8 = inlined_call_operand.vmem [shape: f32[2,96], index: 8, kind: input, shape index: {}]
  %s9 = inlined_call_operand.vmem [shape: f32[2,96], index: 9, kind: input, shape index: {}]
  %s10 = inlined_call_operand.vmem [shape: bf16[32,32], index: 10, kind: input, shape index: {}]
  %s11 = inlined_call_operand.vmem [shape: f32[2,8,32], index: 11, kind: output, shape index: {0}, may-alias: {2,11}]
  %s12 = inlined_call_operand.vmem [shape: f32[8,32], index: 12, kind: output, shape index: {1}]
  %s13 = inlined_call_operand.vmem [shape: f32[8,8], index: 13, kind: output, shape index: {2}]
  %14 = xla_tuple %s11, %s12, %s13
  %s15 = sld [smem:[#allocation0]]
  $region70: #{decoder_forward.2} parent=0
    _
  %s17 = ssub.s32 1, %s15
  %s18 = scalar_select 0, %s17, %s15
  // Predicated region
  $region2: #{decoder_forward.2} parent=0 // pred_check
    _
  $region3: #{decoder_forward.2} parent=0 // pred_check_branch
    %20 = sbr.rel (0) target = $region5
  $region4: #{decoder_forward.2} parent=0 // pred_region
    _
  $region5: #{decoder_forward.2} parent=0 // pred_fallthru
    _
  // Predicated region
  $region6: #{decoder_forward.2} parent=0 // pred_check
    _
  $region7: #{decoder_forward.2} parent=0 // pred_check_branch
    %22 = sbr.rel (0) target = $region9
  $region8: #{decoder_forward.2} parent=0 // pred_region
    _
  $region9: #{decoder_forward.2} parent=0 // pred_fallthru
    _
  // Predicated region
  $region10: #{decoder_forward.2} parent=0 // pred_check
    _
  $region11: #{decoder_forward.2} parent=0 // pred_check_branch
    %24 = sbr.rel (0) target = $region13
  $region12: #{decoder_forward.2} parent=0 // pred_region
    _
  $region13: #{decoder_forward.2} parent=0 // pred_fallthru
    _
  // Predicated region
  $region14: #{decoder_forward.2} parent=0 // pred_check
    _
  $region15: #{decoder_forward.2} parent=0 // pred_check_branch
    %26 = sbr.rel (0) target = $region17
  $region16: #{decoder_forward.2} parent=0 // pred_region
    _
  $region17: #{decoder_forward.2} parent=0 // pred_fallthru
    _
  // Predicated region
  $region18: #{decoder_forward.2} parent=0 // pred_check
    _
  $region19: #{decoder_forward.2} parent=0 // pred_check_branch
    %28 = sbr.rel (0) target = $region21
  $region20: #{decoder_forward.2} parent=0 // pred_region
    _
  $region21: #{decoder_forward.2} parent=0 // pred_fallthru
    _
  // Predicated region
  $region22: #{decoder_forward.2} parent=0 // pred_check
    _
  $region23: #{decoder_forward.2} parent=0 // pred_check_branch
    %30 = sbr.rel (0) target = $region25
  $region24: #{decoder_forward.2} parent=0 // pred_region
    _
  $region25: #{decoder_forward.2} parent=0 // pred_fallthru
    _
  // Predicated region
  $region26: #{decoder_forward.2} parent=0 // pred_check
    _
  $region27: #{decoder_forward.2} parent=0 // pred_check_branch
    %32 = sbr.rel (0) target = $region29
  $region28: #{decoder_forward.2} parent=0 // pred_region
    _
  $region29: #{decoder_forward.2} parent=0 // pred_fallthru
    _
  // Predicated region
  $region30: #{decoder_forward.2} parent=0 // pred_check
    _
  $region31: #{decoder_forward.2} parent=0 // pred_check_branch
    %34 = sbr.rel (0) target = $region33
  $region32: #{decoder_forward.2} parent=0 // pred_region
    _
  $region33: #{decoder_forward.2} parent=0 // pred_fallthru
    _
  // Predicated region
  $region34: #{decoder_forward.2} parent=0 // pred_check
    _
  $region35: #{decoder_forward.2} parent=0 // pred_check_branch
    %36 = sbr.rel (0) target = $region37
  $region36: #{decoder_forward.2} parent=0 // pred_region
    _
  $region37: #{decoder_forward.2} parent=0 // pred_fallthru
    _
  // Predicated region
  $region38: #{decoder_forward.2} parent=0 // pred_check
    _
  $region39: #{decoder_forward.2} parent=0 // pred_check_branch
    %38 = sbr.rel (0) target = $region41
  $region40: #{decoder_forward.2} parent=0 // pred_region
    _
  $region41: #{decoder_forward.2} parent=0 // pred_fallthru
    _
  // Predicated region
  $region42: #{decoder_forward.2} parent=0 // pred_check
    _
  $region43: #{decoder_forward.2} parent=0 // pred_check_branch
    %40 = sbr.rel (0) target = $region45
  $region44: #{decoder_forward.2} parent=0 // pred_region
    _
  $region45: #{decoder_forward.2} parent=0 // pred_fallthru
    _
  %v42 = vld [vmem:[%s0] sm:$0xf]
  %v43 = vld [vmem:[%s1] sm:$0xf]
  %v44 = vld [vmem:[%s2] sm:$0xff]
  %v45 = vld [vmem:[%s4] sm:$0xf]
  %v46 = vld [vmem:[%s4 + $0x4] sm:$0xf]
  %v47 = vld [vmem:[%s4 + $0x8] sm:$0xf]
  %v48 = vld [vmem:[%s4 + $0xc] sm:$0xf]
  %v49 = vld [vmem:[%s5] sm:$0xf]
  %v50 = vld [vmem:[%s5 + $0x4] sm:$0xf]
  %v51 = vld [vmem:[%s5 + $0x8] sm:$0xf]
  %v52 = vld [vmem:[%s5 + $0xc] sm:$0xf]
  %v57 = vunpack.c.l.b16 %v49
  %v58 = vunpack.c.l.b16 %v50
  %v59 = vunpack.c.l.b16 %v51
  %v60 = vunpack.c.l.b16 %v52
  %v61 = vpack.c.b16 %v58, %v57
  %v62 = vpack.c.b16 %v60, %v59
  %vm65 = vcmask 261120
  %v67 = vsel %vm65, %v43, 0
  %69 = vmatpush.bf16.msra.mxu0 0
  %70 = vmatpush.bf16.msra.mxu0 0
  %71 = vmatpush.bf16.msra.mxu0 0
  %72 = vmatpush.bf16.msra.mxu0 0
  %73 = vmatpush.bf16.msra.mxu0 0
  %74 = vmatpush.bf16.msra.mxu0 0
  %75 = vmatpush.bf16.msra.mxu0 %v62
  %76 = vmatpush.bf16.msra.mxu0 %v61
  %77 = vmatmul.bf16.gmra.mxu0 %v67
  %v78 = vpop.f32.mrf.mxu0
  %v79 = vadd.f32 0.0, %v78
  %v80 = vpop.f32.mrf.mxu0
  %81 = vdwg.mxu0
  %v86 = vunpack.c.l.b16 %v45
  %v87 = vunpack.c.l.b16 %v46
  %v88 = vunpack.c.l.b16 %v47
  %v89 = vunpack.c.l.b16 %v48
  %v90 = vpack.c.b16 %v87, %v86
  %v91 = vpack.c.b16 %v89, %v88
  %v95 = vsel %vm65, %v42, 0
  %97 = vmatpush.bf16.msra.mxu0 0
  %98 = vmatpush.bf16.msra.mxu0 0
  %99 = vmatpush.bf16.msra.mxu0 0
  %100 = vmatpush.bf16.msra.mxu0 0
  %101 = vmatpush.bf16.msra.mxu0 0
  %102 = vmatpush.bf16.msra.mxu0 0
  %103 = vmatpush.bf16.msra.mxu0 %v91
  %104 = vmatpush.bf16.msra.mxu0 %v90
  %105 = vmatmul.bf16.gmra.mxu0 %v95
  %v106 = vpop.f32.mrf.mxu0
  %v107 = vadd.f32 %v79, %v106
  %v108 = vpop.f32.mrf.mxu0
  %109 = vdwg.mxu0
  %v110 = vld [vmem:[%s8] sm:$0x1]
  %v111 = vperm.slane %v110, 0
  %v112 = vadd.f32 %v107, %v111
  %v113 = vpack.c.bf16 %v44, %v44
  %v114 = vld [vmem:[%s7] sm:$0xf]
  %v115 = vld [vmem:[%s7 + $0x4] sm:$0xf]
  %v116 = vld [vmem:[%s7 + $0x8] sm:$0xf]
  %v117 = vld [vmem:[%s7 + $0xc] sm:$0xf]
  %v118 = vld [vmem:[%s9] sm:$0x1]
  %v119 = vperm.slane %v118, 0
  %v124 = vunpack.c.l.b16 %v114
  %v125 = vunpack.c.l.b16 %v115
  %v126 = vunpack.c.l.b16 %v116
  %v127 = vunpack.c.l.b16 %v117
  %v128 = vpack.c.b16 %v125, %v124
  %v129 = vpack.c.b16 %v127, %v126
  %v133 = vsel %vm65, %v113, 0
  %135 = vmatpush.bf16.msra.mxu0 0
  %136 = vmatpush.bf16.msra.mxu0 0
  %137 = vmatpush.bf16.msra.mxu0 0
  %138 = vmatpush.bf16.msra.mxu0 0
  %139 = vmatpush.bf16.msra.mxu0 0
  %140 = vmatpush.bf16.msra.mxu0 0
  %141 = vmatpush.bf16.msra.mxu0 %v129
  %142 = vmatpush.bf16.msra.mxu0 %v128
  %143 = vmatmul.bf16.gmra.mxu0 %v133
  %v144 = vpop.f32.mrf.mxu0
  %v145 = vadd.f32 %v119, %v144
  %v146 = vpop.f32.mrf.mxu0
  %147 = vdwg.mxu0
  %v148 = vadd.f32 %v112, %v145
  %v149 = vxor.u32 %v148, 2147483648
  %v150 = vmul.f32 %v149, 1.442695
  %v151 = vpow.pop %v150
  %v152 = vadd.f32 %v151, 1.0
  %v153 = vrcp.pop %v152
  %v154 = vmul.f32 %v152, %v153
  %v155 = vsub.f32 1.0, %v154
  %v156 = vmul.f32 %v153, %v155
  %v157 = vadd.f32 %v153, %v156
  %vm158 = vweird.f32 %v152
  %vm159 = vweird.f32 %v153
  %vm160 = vmor %vm158, %vm159
  %v161 = vsel %vm160, %v153, %v157
  %v162 = vand.u32 2147483647, %v152
  %vm163 = vcmp.eq.f32.partialorder %v162, 8.507059e+37
  %v164 = vand.u32 %v152, 2147483648
  %v165 = vor.u32 1.1754944e-38, %v164
  %v166 = vsel %vm163, %v165, %v161
  %v167 = vmul.f32 1.0, %v166
  %169 = vrot.lane.b32.xlu0 %v145, 64
  %v170 = vpop.permute.xlu0 %169
  %v172 = vmul.f32 %v167, %v170
  %174 = vrot.lane.b32.xlu0 %v172, 64
  %v175 = vpop.permute.xlu0 %174
  %v177 = vadd.f32 %v112, %v175
  %v178 = vtanh.pop %v177
  %v179 = vsub.f32 1.0, %v167
  %181 = vrot.lane.b32.xlu0 %v178, 96
  %v182 = vpop.permute.xlu0 %181
  %v184 = vmul.f32 %v179, %v182
  %186 = vrot.lane.b32.xlu0 %v44, 32
  %v187 = vpop.permute.xlu0 %186
  %v189 = vmul.f32 %v167, %v187
  %v190 = vadd.f32 %v184, %v189
  %192 = vrot.lane.b32.xlu0 %v190, 96
  %v193 = vpop.permute.xlu0 %192
  %195 = vst.msk [vmem:[%s11] sm:$0xff] %vm65, %v193
  %s196 = scalar_lea.vmem %s2, 8
  %v197 = vld [vmem:[%s196] sm:$0xff]
  %v198 = vpack.c.bf16 %v190, %v190
  %v199 = vld [vmem:[%s6] sm:$0xf]
  %v200 = vld [vmem:[%s6 + $0x4] sm:$0xf]
  %v201 = vld [vmem:[%s6 + $0x8] sm:$0xf]
  %v202 = vld [vmem:[%s6 + $0xc] sm:$0xf]
  %v203 = vld [vmem:[%s8 + $0x1] sm:$0x1]
  %v204 = vperm.slane %v203, 0
  %206 = vrot.lane.b32.xlu0 %v198, 96
  %v207 = vpop.permute.xlu0 %206
  %v212 = vunpack.c.l.b16 %v199
  %v213 = vunpack.c.l.b16 %v200
  %v214 = vunpack.c.l.b16 %v201
  %v215 = vunpack.c.l.b16 %v202
  %v216 = vpack.c.b16 %v213, %v212
  %v217 = vpack.c.b16 %v215, %v214
  %v221 = vsel %vm65, %v207, 0
  %223 = vmatpush.bf16.msra.mxu0 0
  %224 = vmatpush.bf16.msra.mxu0 0
  %225 = vmatpush.bf16.msra.mxu0 0
  %226 = vmatpush.bf16.msra.mxu0 0
  %227 = vmatpush.bf16.msra.mxu0 0
  %228 = vmatpush.bf16.msra.mxu0 0
  %229 = vmatpush.bf16.msra.mxu0 %v217
  %230 = vmatpush.bf16.msra.mxu0 %v216
  %231 = vmatmul.bf16.gmra.mxu0 %v221
  %v232 = vpop.f32.mrf.mxu0
  %v233 = vadd.f32 %v204, %v232
  %v234 = vpop.f32.mrf.mxu0
  %235 = vdwg.mxu0
  %v236 = vpack.c.bf16 %v197, %v197
  %s237 = scalar_lea.vmem %s7, 16
  %v238 = vld [vmem:[%s237] sm:$0xf]
  %v239 = vld [vmem:[%s237 + $0x4] sm:$0xf]
  %v240 = vld [vmem:[%s237 + $0x8] sm:$0xf]
  %v241 = vld [vmem:[%s237 + $0xc] sm:$0xf]
  %v242 = vld [vmem:[%s9 + $0x1] sm:$0x1]
  %v243 = vperm.slane %v242, 0
  %v248 = vunpack.c.l.b16 %v238
  %v249 = vunpack.c.l.b16 %v239
  %v250 = vunpack.c.l.b16 %v240
  %v251 = vunpack.c.l.b16 %v241
  %v252 = vpack.c.b16 %v249, %v248
  %v253 = vpack.c.b16 %v251, %v250
  %v257 = vsel %vm65, %v236, 0
  %259 = vmatpush.bf16.msra.mxu0 0
  %260 = vmatpush.bf16.msra.mxu0 0
  %261 = vmatpush.bf16.msra.mxu0 0
  %262 = vmatpush.bf16.msra.mxu0 0
  %263 = vmatpush.bf16.msra.mxu0 0
  %264 = vmatpush.bf16.msra.mxu0 0
  %265 = vmatpush.bf16.msra.mxu0 %v253
  %266 = vmatpush.bf16.msra.mxu0 %v252
  %267 = vmatmul.bf16.gmra.mxu0 %v257
  %v268 = vpop.f32.mrf.mxu0
  %v269 = vadd.f32 %v243, %v268
  %v270 = vpop.f32.mrf.mxu0
  %271 = vdwg.mxu0
  %v272 = vadd.f32 %v233, %v269
  %v273 = vxor.u32 %v272, 2147483648
  %v274 = vmul.f32 %v273, 1.442695
  %v275 = vpow.pop %v274
  %v276 = vadd.f32 %v275, 1.0
  %v277 = vrcp.pop %v276
  %v278 = vmul.f32 %v276, %v277
  %v279 = vsub.f32 1.0, %v278
  %v280 = vmul.f32 %v277, %v279
  %v281 = vadd.f32 %v277, %v280
  %vm282 = vweird.f32 %v276
  %vm283 = vweird.f32 %v277
  %vm284 = vmor %vm282, %vm283
  %v285 = vsel %vm284, %v277, %v281
  %v286 = vand.u32 2147483647, %v276
  %vm287 = vcmp.eq.f32.partialorder %v286, 8.507059e+37
  %v288 = vand.u32 %v276, 2147483648
  %v289 = vor.u32 1.1754944e-38, %v288
  %v290 = vsel %vm287, %v289, %v285
  %v291 = vmul.f32 1.0, %v290
  %293 = vrot.lane.b32.xlu0 %v269, 64
  %v294 = vpop.permute.xlu0 %293
  %v296 = vmul.f32 %v291, %v294
  %298 = vrot.lane.b32.xlu0 %v296, 64
  %v299 = vpop.permute.xlu0 %298
  %v301 = vadd.f32 %v233, %v299
  %v302 = vtanh.pop %v301
  %v303 = vsub.f32 1.0, %v291
  %305 = vrot.lane.b32.xlu0 %v302, 96
  %v306 = vpop.permute.xlu0 %305
  %v308 = vmul.f32 %v303, %v306
  %310 = vrot.lane.b32.xlu0 %v197, 32
  %v311 = vpop.permute.xlu0 %310
  %v313 = vmul.f32 %v291, %v311
  %v314 = vadd.f32 %v308, %v313
  %316 = vrot.lane.b32.xlu0 %v314, 96
  %v317 = vpop.permute.xlu0 %316
  %s319 = scalar_lea.vmem %s11, 8
  %320 = vst.msk [vmem:[%s319] sm:$0xff] %vm65, %v317
  %v321 = vpack.c.bf16 %v314, %v314
  %v322 = vld [vmem:[%s10] sm:$0xf]
  %v323 = vld [vmem:[%s10 + $0x4] sm:$0xf]
  %v324 = vld [vmem:[%s10 + $0x8] sm:$0xf]
  %v325 = vld [vmem:[%s10 + $0xc] sm:$0xf]
  %327 = vrot.lane.b32.xlu0 %v321, 96
  %v328 = vpop.permute.xlu0 %327
  %v333 = vunpack.c.l.b16 %v322
  %v334 = vunpack.c.l.b16 %v323
  %v335 = vunpack.c.l.b16 %v324
  %v336 = vunpack.c.l.b16 %v325
  %v337 = vpack.c.b16 %v334, %v333
  %v338 = vpack.c.b16 %v336, %v335
  %v342 = vsel %vm65, %v328, 0
  %344 = vmatpush.bf16.msra.mxu0 0
  %345 = vmatpush.bf16.msra.mxu0 0
  %346 = vmatpush.bf16.msra.mxu0 0
  %347 = vmatpush.bf16.msra.mxu0 0
  %348 = vmatpush.bf16.msra.mxu0 0
  %349 = vmatpush.bf16.msra.mxu0 0
  %350 = vmatpush.bf16.msra.mxu0 %v338
  %351 = vmatpush.bf16.msra.mxu0 %v337
  %352 = vmatmul.bf16.gmra.mxu0 %v342
  %v353 = vpop.f32.mrf.mxu0
  %v354 = vadd.f32 0.0, %v353
  %v355 = vpop.f32.mrf.mxu0
  %356 = vdwg.mxu0
  %v357 = vld [vmem:[%s3] sm:$0xf]
  %v358 = vld [vmem:[%s3 + $0x4] sm:$0xf]
  %v359 = vld [vmem:[%s3 + $0x8] sm:$0xf]
  %v360 = vld [vmem:[%s3 + $0xc] sm:$0xf]
  %v361 = vld [vmem:[%s3 + $0x10] sm:$0xf]
  %v362 = vld [vmem:[%s3 + $0x14] sm:$0xf]
  %v363 = vld [vmem:[%s3 + $0x18] sm:$0xf]
  %v364 = vld [vmem:[%s3 + $0x1c] sm:$0xf]
  %v365 = vunpack.c.l.bf16 %v357
  %v366 = vunpack.c.l.bf16 %v358
  %v367 = vunpack.c.l.bf16 %v359
  %v368 = vunpack.c.l.bf16 %v360
  %v369 = vunpack.c.l.bf16 %v361
  %v370 = vunpack.c.l.bf16 %v362
  %v371 = vunpack.c.l.bf16 %v363
  %v372 = vunpack.c.l.bf16 %v364
  %v374 = vrot.slane %v354, 1
  %v375 = vrot.slane %v354, 2
  %v376 = vrot.slane %v354, 3
  %v377 = vrot.slane %v354, 4
  %v378 = vrot.slane %v354, 5
  %v379 = vrot.slane %v354, 6
  %v380 = vrot.slane %v354, 7
  %v381 = vperm.slane %v354, 0
  %v382 = vperm.slane %v374, 0
  %v383 = vperm.slane %v375, 0
  %v384 = vperm.slane %v376, 0
  %v385 = vperm.slane %v377, 0
  %v386 = vperm.slane %v378, 0
  %v387 = vperm.slane %v379, 0
  %v388 = vperm.slane %v380, 0
  %v397 = vmul.f32 %v381, %v365
  %v398 = vmul.f32 %v382, %v366
  %v399 = vmul.f32 %v383, %v367
  %v400 = vmul.f32 %v384, %v368
  %v401 = vmul.f32 %v385, %v369
  %v402 = vmul.f32 %v386, %v370
  %v403 = vmul.f32 %v387, %v371
  %v404 = vmul.f32 %v388, %v372
  %v405 = vsel %vm65, %v397, 0.0
  %406 = vadd.xlane.f32.xlu0 %v405
  %v407 = vpop.xlane.xlu0 %406
  %v408 = vsel %vm65, %v398, 0.0
  %409 = vadd.xlane.f32.xlu0 %v408
  %v410 = vpop.xlane.xlu0 %409
  %v411 = vsel %vm65, %v399, 0.0
  %412 = vadd.xlane.f32.xlu0 %v411
  %v413 = vpop.xlane.xlu0 %412
  %v414 = vsel %vm65, %v400, 0.0
  %415 = vadd.xlane.f32.xlu0 %v414
  %v416 = vpop.xlane.xlu0 %415
  %v417 = vsel %vm65, %v401, 0.0
  %418 = vadd.xlane.f32.xlu0 %v417
  %v419 = vpop.xlane.xlu0 %418
  %v420 = vsel %vm65, %v402, 0.0
  %421 = vadd.xlane.f32.xlu0 %v420
  %v422 = vpop.xlane.xlu0 %421
  %v423 = vsel %vm65, %v403, 0.0
  %424 = vadd.xlane.f32.xlu0 %v423
  %v425 = vpop.xlane.xlu0 %424
  %v426 = vsel %vm65, %v404, 0.0
  %427 = vadd.xlane.f32.xlu0 %v426
  %v428 = vpop.xlane.xlu0 %427
  %v437 = vlaneseq
  %v438 = vand.u32 %v437, 127
  %v439 = vperm.slane %v407, %v438
  %v440 = vperm.slane %v410, %v438
  %v441 = vperm.slane %v413, %v438
  %v442 = vperm.slane %v416, %v438
  %v443 = vperm.slane %v419, %v438
  %v444 = vperm.slane %v422, %v438
  %v445 = vperm.slane %v425, %v438
  %v446 = vperm.slane %v428, %v438
  %vm447 = vcmask 1041409
  %v448 = vsel %vm447, %v440, %v439
  %vm449 = vcmask 1042434
  %v450 = vsel %vm449, %v441, %v448
  %vm451 = vcmask 1043459
  %v452 = vsel %vm451, %v442, %v450
  %vm453 = vcmask 1044484
  %v454 = vsel %vm453, %v443, %v452
  %vm455 = vcmask 1045509
  %v456 = vsel %vm455, %v444, %v454
  %vm457 = vcmask 1046534
  %v458 = vsel %vm457, %v445, %v456
  %vm459 = vcmask 1047559
  %v460 = vsel %vm459, %v446, %v458
  %vm462 = vcmask 64512
  %v463 = vsel %vm462, %v460, -inf
  %464 = vmax.xlane.f32.xlu0 %v463
  %v465 = vpop.xlane.xlu0 %464
  %v467 = vperm.slane %v465, 0
  %v468 = vperm.slane %v465, 1
  %v469 = vperm.slane %v465, 2
  %v470 = vperm.slane %v465, 3
  %v471 = vperm.slane %v465, 4
  %v472 = vperm.slane %v465, 5
  %v473 = vperm.slane %v465, 6
  %v474 = vperm.slane %v465, 7
  %v483 = vsub.f32 %v407, %v467
  %v484 = vsub.f32 %v410, %v468
  %v485 = vsub.f32 %v413, %v469
  %v486 = vsub.f32 %v416, %v470
  %v487 = vsub.f32 %v419, %v471
  %v488 = vsub.f32 %v422, %v472
  %v489 = vsub.f32 %v425, %v473
  %v490 = vsub.f32 %v428, %v474
  %v491 = vmul.f32 %v483, 1.442695
  %v492 = vpow.pop %v491
  %v493 = vmul.f32 %v484, 1.442695
  %v494 = vpow.pop %v493
  %v495 = vmul.f32 %v485, 1.442695
  %v496 = vpow.pop %v495
  %v497 = vmul.f32 %v486, 1.442695
  %v498 = vpow.pop %v497
  %v499 = vmul.f32 %v487, 1.442695
  %v500 = vpow.pop %v499
  %v501 = vmul.f32 %v488, 1.442695
  %v502 = vpow.pop %v501
  %v503 = vmul.f32 %v489, 1.442695
  %v504 = vpow.pop %v503
  %v505 = vmul.f32 %v490, 1.442695
  %v506 = vpow.pop %v505
  %515 = vset.pattern.permute.xlu0 0
  %516 = vperm.xlu0 %515, %v492
  %v517 = vpop.permute.xlu0 %516
  %518 = vset.pattern.permute.xlu0 0
  %519 = vperm.xlu0 %518, %v494
  %v520 = vpop.permute.xlu0 %519
  %521 = vset.pattern.permute.xlu0 0
  %522 = vperm.xlu0 %521, %v496
  %v523 = vpop.permute.xlu0 %522
  %524 = vset.pattern.permute.xlu0 0
  %525 = vperm.xlu0 %524, %v498
  %v526 = vpop.permute.xlu0 %525
  %527 = vset.pattern.permute.xlu0 0
  %528 = vperm.xlu0 %527, %v500
  %v529 = vpop.permute.xlu0 %528
  %530 = vset.pattern.permute.xlu0 0
  %531 = vperm.xlu0 %530, %v502
  %v532 = vpop.permute.xlu0 %531
  %533 = vset.pattern.permute.xlu0 0
  %534 = vperm.xlu0 %533, %v504
  %v535 = vpop.permute.xlu0 %534
  %536 = vset.pattern.permute.xlu0 0
  %537 = vperm.xlu0 %536, %v506
  %v538 = vpop.permute.xlu0 %537
  %v539 = vperm.slane %v517, %v438
  %v540 = vperm.slane %v520, %v438
  %v541 = vperm.slane %v523, %v438
  %v542 = vperm.slane %v526, %v438
  %v543 = vperm.slane %v529, %v438
  %v544 = vperm.slane %v532, %v438
  %v545 = vperm.slane %v535, %v438
  %v546 = vperm.slane %v538, %v438
  %v547 = vsel %vm447, %v540, %v539
  %v548 = vsel %vm449, %v541, %v547
  %v549 = vsel %vm451, %v542, %v548
  %v550 = vsel %vm453, %v543, %v549
  %v551 = vsel %vm455, %v544, %v550
  %v552 = vsel %vm457, %v545, %v551
  %v553 = vsel %vm459, %v546, %v552
  %v555 = vsel %vm462, %v553, 0.0
  %556 = vadd.xlane.f32.xlu0 %v555
  %v557 = vpop.xlane.xlu0 %556
  %v558 = vrcp.pop %v557
  %v560 = vperm.slane %v558, 0
  %v561 = vperm.slane %v558, 1
  %v562 = vperm.slane %v558, 2
  %v563 = vperm.slane %v558, 3
  %v564 = vperm.slane %v558, 4
  %v565 = vperm.slane %v558, 5
  %v566 = vperm.slane %v558, 6
  %v567 = vperm.slane %v558, 7
  %v576 = vmul.f32 %v492, %v560
  %v577 = vmul.f32 %v494, %v561
  %v578 = vmul.f32 %v496, %v562
  %v579 = vmul.f32 %v498, %v563
  %v580 = vmul.f32 %v500, %v564
  %v581 = vmul.f32 %v502, %v565
  %v582 = vmul.f32 %v504, %v566
  %v583 = vmul.f32 %v506, %v567
  %592 = vset.pattern.permute.xlu0 0
  %593 = vperm.xlu0 %592, %v576
  %v594 = vpop.permute.xlu0 %593
  %595 = vset.pattern.permute.xlu0 0
  %596 = vperm.xlu0 %595, %v577
  %v597 = vpop.permute.xlu0 %596
  %598 = vset.pattern.permute.xlu0 0
  %599 = vperm.xlu0 %598, %v578
  %v600 = vpop.permute.xlu0 %599
  %601 = vset.pattern.permute.xlu0 0
  %602 = vperm.xlu0 %601, %v579
  %v603 = vpop.permute.xlu0 %602
  %604 = vset.pattern.permute.xlu0 0
  %605 = vperm.xlu0 %604, %v580
  %v606 = vpop.permute.xlu0 %605
  %607 = vset.pattern.permute.xlu0 0
  %608 = vperm.xlu0 %607, %v581
  %v609 = vpop.permute.xlu0 %608
  %610 = vset.pattern.permute.xlu0 0
  %611 = vperm.xlu0 %610, %v582
  %v612 = vpop.permute.xlu0 %611
  %613 = vset.pattern.permute.xlu0 0
  %614 = vperm.xlu0 %613, %v583
  %v615 = vpop.permute.xlu0 %614
  %v616 = vperm.slane %v594, %v438
  %v617 = vperm.slane %v597, %v438
  %v618 = vperm.slane %v600, %v438
  %v619 = vperm.slane %v603, %v438
  %v620 = vperm.slane %v606, %v438
  %v621 = vperm.slane %v609, %v438
  %v622 = vperm.slane %v612, %v438
  %v623 = vperm.slane %v615, %v438
  %v624 = vsel %vm447, %v617, %v616
  %v625 = vsel %vm449, %v618, %v624
  %v626 = vsel %vm451, %v619, %v625
  %v627 = vsel %vm453, %v620, %v626
  %v628 = vsel %vm455, %v621, %v627
  %v629 = vsel %vm457, %v622, %v628
  %v630 = vsel %vm459, %v623, %v629
  %632 = vst.msk [vmem:[%s13] sm:$0xff] %vm462, %v630
  %v641 = vmul.f32 %v594, %v365
  %v642 = vmul.f32 %v597, %v366
  %v643 = vmul.f32 %v600, %v367
  %v644 = vmul.f32 %v603, %v368
  %v645 = vmul.f32 %v606, %v369
  %v646 = vmul.f32 %v609, %v370
  %v647 = vmul.f32 %v612, %v371
  %v648 = vmul.f32 %v615, %v372
  %v649 = vsel %vm65, %v641, 0.0
  %v650 = vrot.slane %v649, 4
  %v651 = vadd.f32 %v649, %v650
  %v652 = vrot.slane %v651, 2
  %v653 = vadd.f32 %v651, %v652
  %v654 = vrot.slane %v653, 1
  %v655 = vadd.f32 %v653, %v654
  %v656 = vsel %vm65, %v642, 0.0
  %v657 = vrot.slane %v656, 4
  %v658 = vadd.f32 %v656, %v657
  %v659 = vrot.slane %v658, 2
  %v660 = vadd.f32 %v658, %v659
  %v661 = vrot.slane %v660, 1
  %v662 = vadd.f32 %v660, %v661
  %v663 = vsel %vm65, %v643, 0.0
  %v664 = vrot.slane %v663, 4
  %v665 = vadd.f32 %v663, %v664
  %v666 = vrot.slane %v665, 2
  %v667 = vadd.f32 %v665, %v666
  %v668 = vrot.slane %v667, 1
  %v669 = vadd.f32 %v667, %v668
  %v670 = vsel %vm65, %v644, 0.0
  %v671 = vrot.slane %v670, 4
  %v672 = vadd.f32 %v670, %v671
  %v673 = vrot.slane %v672, 2
  %v674 = vadd.f32 %v672, %v673
  %v675 = vrot.slane %v674, 1
  %v676 = vadd.f32 %v674, %v675
  %v677 = vsel %vm65, %v645, 0.0
  %v678 = vrot.slane %v677, 4
  %v679 = vadd.f32 %v677, %v678
  %v680 = vrot.slane %v679, 2
  %v681 = vadd.f32 %v679, %v680
  %v682 = vrot.slane %v681, 1
  %v683 = vadd.f32 %v681, %v682
  %v684 = vsel %vm65, %v646, 0.0
  %v685 = vrot.slane %v684, 4
  %v686 = vadd.f32 %v684, %v685
  %v687 = vrot.slane %v686, 2
  %v688 = vadd.f32 %v686, %v687
  %v689 = vrot.slane %v688, 1
  %v690 = vadd.f32 %v688, %v689
  %v691 = vsel %vm65, %v647, 0.0
  %v692 = vrot.slane %v691, 4
  %v693 = vadd.f32 %v691, %v692
  %v694 = vrot.slane %v693, 2
  %v695 = vadd.f32 %v693, %v694
  %v696 = vrot.slane %v695, 1
  %v697 = vadd.f32 %v695, %v696
  %v698 = vsel %vm65, %v648, 0.0
  %v699 = vrot.slane %v698, 4
  %v700 = vadd.f32 %v698, %v699
  %v701 = vrot.slane %v700, 2
  %v702 = vadd.f32 %v700, %v701
  %v703 = vrot.slane %v702, 1
  %v704 = vadd.f32 %v702, %v703
  %v713 = vsel %vm447, %v662, %v655
  %v714 = vsel %vm449, %v669, %v713
  %v715 = vsel %vm451, %v676, %v714
  %v716 = vsel %vm453, %v683, %v715
  %v717 = vsel %vm455, %v690, %v716
  %v718 = vsel %vm457, %v697, %v717
  %v719 = vsel %vm459, %v704, %v718
  %721 = vst.msk [vmem:[%s12] sm:$0xff] %vm65, %v719
  // Predicated region
  $region46: #{decoder_forward.2} parent=0 // pred_check
    _
  $region47: #{decoder_forward.2} parent=0 // pred_check_branch
    %723 = sbr.rel (0) target = $region49
  $region48: #{decoder_forward.2} parent=0 // pred_region
    _
  $region49: #{decoder_forward.2} parent=0 // pred_fallthru
    _
  // Predicated region
  $region50: #{decoder_forward.2} parent=0 // pred_check
    _
  $region51: #{decoder_forward.2} parent=0 // pred_check_branch
    %725 = sbr.rel (0) target = $region53
  $region52: #{decoder_forward.2} parent=0 // pred_region
    _
  $region53: #{decoder_forward.2} parent=0 // pred_fallthru
    _
  // Predicated region
  $region54: #{decoder_forward.2} parent=0 // pred_check
    _
  $region55: #{decoder_forward.2} parent=0 // pred_check_branch
    %727 = sbr.rel (0) target = $region57
  $region56: #{decoder_forward.2} parent=0 // pred_region
    _
  $region57: #{decoder_forward.2} parent=0 // pred_fallthru
    _
  // Predicated region
  $region58: #{decoder_forward.2} parent=0 // pred_check
    _
  $region59: #{decoder_forward.2} parent=0 // pred_check_branch
    %729 = sbr.rel (0) target = $region61
  $region60: #{decoder_forward.2} parent=0 // pred_region
    _
  $region61: #{decoder_forward.2} parent=0 // pred_fallthru
    _
  // Predicated region
  $region62: #{decoder_forward.2} parent=0 // pred_check
    _
  $region63: #{decoder_forward.2} parent=0 // pred_check_branch
    %731 = sbr.rel (0) target = $region65
  $region64: #{decoder_forward.2} parent=0 // pred_region
    _
  $region65: #{decoder_forward.2} parent=0 // pred_fallthru
    _
  // Predicated region
  $region66: #{decoder_forward.2} parent=0 // pred_check
    _
  $region67: #{decoder_forward.2} parent=0 // pred_check_branch
    %733 = sbr.rel (0) target = $region69
  $region68: #{decoder_forward.2} parent=0 // pred_region
    _
  $region69: #{decoder_forward.2} parent=0 // pred_fallthru
    _

</llo_original>
